<compile_context>
chip_gen: v6e
topology: v6e:2x2x1
jax: 0.10.0
libtpu: 0.0.40
codegen_flags: <defaults>
</compile_context>

<pallas_src>
import jax
import jax.numpy as jnp
from jax.experimental import pallas as pl
from jax.experimental.pallas import tpu as pltpu


def _round_up(n, m):
    return ((n + m - 1) // m) * m


def mlp_kernel(x_ref, w1_ref, b1_ref, w2_ref, b2_ref, o_ref):
    # x:  [TB, In*f]      (f = batch-fold factor, lane-dense when f > 1)
    # w1: [In*f, H*f]     (block-diagonal copy of the original w1 when f > 1)
    # b1: [1, H*f]        w2: [H*f, f]        b2: SMEM scalar [1]
    # o:  [TB, f]
    h = jnp.dot(x_ref[...], w1_ref[...], preferred_element_type=jnp.float32)
    h = jnp.maximum(h + b1_ref[...], 0.0)

    # Layer 2 on the MXU: K = H*f is dense after folding, N = f.
    z = jnp.dot(h, w2_ref[...], preferred_element_type=jnp.float32) + b2_ref[0]

    # sigmoid(z) == 0.5 * (tanh(z / 2) + 1): one EUP op per vreg (vs exp + recip).
    o_ref[...] = (0.5 * (jnp.tanh(0.5 * z) + 1.0)).astype(o_ref.dtype)


def neural_network_activation2(x, w1, b1, w2, b2, *, block_rows=8192, min_tiles=2):
    """x: [B, In] f32; w1: [In, H]; b1: [H]; w2: [H, 1]; b2: [1] -> [B, 1] f32."""
    B, In = x.shape
    H = w1.shape[1]
    assert w1.shape == (In, H) and b1.shape == (H,)
    assert w2.shape == (H, 1) and b2.shape == (1,)

    # ---- Batch folding: pack `fold` rows into the 128-lane axis when shapes allow.
    fold = 1
    if In == H and 0 < In < 128 and 128 % In == 0 and B % (128 // In) == 0:
        fold = 128 // In

    if fold > 1:
        eye = jnp.eye(fold, dtype=w1.dtype)
        x_k = x.reshape(B // fold, In * fold)            # contiguous reshape: free
        w1_k = jnp.kron(eye, w1)                          # block-diagonal [In*f, H*f]
        b1_k = jnp.tile(b1, fold).reshape(1, H * fold)
        w2_k = jnp.kron(eye, w2)                          # [H*f, f]
    else:
        x_k, w1_k, b1_k, w2_k = x, w1, b1.reshape(1, H), w2
    b2_k = b2.reshape(1)

    Bk, Ink = x_k.shape
    Hk = w1_k.shape[1]

    # ---- Batch tile (in folded rows): big enough to amortize the ~0.35 us/step cost,
    # small enough to stay in scoped VMEM, and split into >= min_tiles steps so both
    # v7x TensorCores get work and the x DMA overlaps compute.
    rows = max(8, block_rows // fold)
    if fold == 1:
        rows = min(rows, 4096)   # lane-padded [rows, In] buffers: keep v5e scoped VMEM happy
    split_cap = _round_up(pl.cdiv(Bk, min_tiles), 8)
    TB = max(8, min(_round_up(rows, 8), split_cap))
    num_tiles = pl.cdiv(Bk, TB)  # ragged last block: OOB rows computed and dropped

    out = pl.pallas_call(
        mlp_kernel,
        out_shape=jax.ShapeDtypeStruct((Bk, fold), jnp.float32),
        grid=(num_tiles,),
        in_specs=[
            pl.BlockSpec((TB, Ink), lambda i: (i, 0)),           # x: tiled over batch
            pl.BlockSpec((Ink, Hk), lambda i: (0, 0)),           # w1: VMEM-resident
            pl.BlockSpec((1, Hk), lambda i: (0, 0)),             # b1: VMEM-resident
            pl.BlockSpec((Hk, fold), lambda i: (0, 0)),          # w2: VMEM-resident
            pl.BlockSpec(memory_space=pltpu.MemorySpace.SMEM),   # b2: scalar in SMEM
        ],
        out_specs=pl.BlockSpec((TB, fold), lambda i: (i, 0)),
        compiler_params=pltpu.CompilerParams(
            dimension_semantics=("parallel",),   # independent batch tiles (megacore)
        ),
    )(x_k, w1_k, b1_k, w2_k, b2_k)

    return out.reshape(B, 1)


if __name__ == "__main__":
    key = jax.random.PRNGKey(0)

    def run_case(batch, input_size, hidden_size, block_rows, subkey):
        k_x, k_w1, k_b1, k_w2, k_b2 = jax.random.split(subkey, 5)
        x = jax.random.normal(k_x, (batch, input_size), dtype=jnp.float32)

        # Deterministic PyTorch-like init: uniform(-1/sqrt(fan_in), 1/sqrt(fan_in)).
        bound1 = 1.0 / jnp.sqrt(input_size)
        w1 = jax.random.uniform(k_w1, (input_size, hidden_size), jnp.float32, -bound1, bound1)
        b1 = jax.random.uniform(k_b1, (hidden_size,), jnp.float32, -bound1, bound1)
        bound2 = 1.0 / jnp.sqrt(hidden_size)
        w2 = jax.random.uniform(k_w2, (hidden_size, 1), jnp.float32, -bound2, bound2)
        b2 = jax.random.uniform(k_b2, (1,), jnp.float32, -bound2, bound2)

        out = neural_network_activation2(x, w1, b1, w2, b2, block_rows=block_rows)
        jax.block_until_ready(out)

        # Pure-JAX reference check.
        ref = jax.nn.sigmoid(jnp.maximum(x @ w1 + b1, 0.0) @ w2 + b2)
        assert out.shape == (batch, 1)
        assert jnp.allclose(out, ref, atol=1e-5, rtol=1e-5), float(jnp.max(jnp.abs(out - ref)))

    k1, k2 = jax.random.split(key)
    # Folded path (In == H == 32 -> 4 rows packed per 128-lane row); small block_rows
    # so the demo exercises a multi-step "parallel" grid plus a ragged last block.
    run_case(batch=200, input_size=32, hidden_size=32, block_rows=64, subkey=k1)
    # Unfolded fallback path (In != H), ragged last block with no wrapper padding.
    run_case(batch=37, input_size=32, hidden_size=48, block_rows=64, subkey=k2)

    print("KERNEL_OK")
</pallas_src>

<mosaic_0001>
module attributes {stable_mosaic.version = 11 : i64} {
  func.func @mlp_kernel(%arg0: i32, %arg1: memref<16x128xf32, #tpu.memory_space<vmem>>, %arg2: memref<128x128xf32, #tpu.memory_space<vmem>>, %arg3: memref<1x128xf32, #tpu.memory_space<vmem>>, %arg4: memref<128x4xf32, #tpu.memory_space<vmem>>, %arg5: memref<1xf32, #tpu.memory_space<smem>>, %arg6: memref<16x4xf32, #tpu.memory_space<vmem>>) attributes {dimension_semantics = [#tpu.dimension_semantics<parallel>], iteration_bounds = array<i64: 4>, scalar_prefetch = 0 : i64, scratch_operands = 0 : i64, tpu.core_type = #tpu.core_type<tc>, window_params = [{transform_indices = @transform_0, window_bounds = array<i64: 16, 128>}, {pipeline_mode = #tpu.pipeline_mode<synchronous>, transform_indices = @transform_1, window_bounds = array<i64: 128, 128>}, {pipeline_mode = #tpu.pipeline_mode<synchronous>, transform_indices = @transform_2, window_bounds = array<i64: 1, 128>}, {pipeline_mode = #tpu.pipeline_mode<synchronous>, transform_indices = @transform_3, window_bounds = array<i64: 128, 4>}, {transform_indices = @transform_4, window_bounds = array<i64: 1>}, {transform_indices = @transform_5, window_bounds = array<i64: 16, 4>}]} {
    %c0 = arith.constant 0 : index
    %c0_0 = arith.constant 0 : index
    %0 = vector.load %arg1[%c0, %c0_0] : memref<16x128xf32, #tpu.memory_space<vmem>>, vector<16x128xf32>
    %c0_1 = arith.constant 0 : index
    %c0_2 = arith.constant 0 : index
    %1 = vector.load %arg2[%c0_1, %c0_2] : memref<128x128xf32, #tpu.memory_space<vmem>>, vector<128x128xf32>
    %cst = arith.constant dense<0.000000e+00> : vector<16x128xf32>
    %2 = tpu.matmul %0, %1, %cst {dimension_numbers = #tpu.dot_dimension_numbers<[1], [0], [0], [1], [0, 0, 1, 1], [], []>} : vector<16x128xf32>, vector<128x128xf32>, vector<16x128xf32> -> vector<16x128xf32>
    %c0_3 = arith.constant 0 : index
    %c0_4 = arith.constant 0 : index
    %3 = vector.load %arg3[%c0_3, %c0_4] : memref<1x128xf32, #tpu.memory_space<vmem>>, vector<1x128xf32>
    %4 = vector.broadcast %3 : vector<1x128xf32> to vector<16x128xf32>
    %5 = arith.addf %2, %4 : vector<16x128xf32>
    %cst_5 = arith.constant 0.000000e+00 : f32
    %6 = vector.broadcast %cst_5 : f32 to vector<16x128xf32>
    %7 = arith.maximumf %5, %6 : vector<16x128xf32>
    %c0_6 = arith.constant 0 : index
    %c0_7 = arith.constant 0 : index
    %8 = vector.load %arg4[%c0_6, %c0_7] : memref<128x4xf32, #tpu.memory_space<vmem>>, vector<128x4xf32>
    %cst_8 = arith.constant dense<0.000000e+00> : vector<16x4xf32>
    %9 = tpu.matmul %7, %8, %cst_8 {dimension_numbers = #tpu.dot_dimension_numbers<[1], [0], [0], [1], [0, 0, 1, 1], [], []>} : vector<16x128xf32>, vector<128x4xf32>, vector<16x4xf32> -> vector<16x4xf32>
    %c0_9 = arith.constant 0 : index
    %10 = memref.load %arg5[%c0_9] : memref<1xf32, #tpu.memory_space<smem>>
    %11 = vector.broadcast %10 : f32 to vector<16x4xf32>
    %12 = arith.addf %9, %11 : vector<16x4xf32>
    %cst_10 = arith.constant 5.000000e-01 : f32
    %13 = vector.broadcast %cst_10 : f32 to vector<16x4xf32>
    %14 = arith.mulf %13, %12 : vector<16x4xf32>
    %15 = math.tanh %14 : vector<16x4xf32>
    %cst_11 = arith.constant 1.000000e+00 : f32
    %16 = vector.broadcast %cst_11 : f32 to vector<16x4xf32>
    %17 = arith.addf %15, %16 : vector<16x4xf32>
    %cst_12 = arith.constant 5.000000e-01 : f32
    %18 = vector.broadcast %cst_12 : f32 to vector<16x4xf32>
    %19 = arith.mulf %18, %17 : vector<16x4xf32>
    %c0_13 = arith.constant 0 : index
    %c0_14 = arith.constant 0 : index
    %20 = vector.load %arg6[%c0_13, %c0_14] : memref<16x4xf32, #tpu.memory_space<vmem>>, vector<16x4xf32>
    tpu.vector_store %arg6[%c0_13, %c0_14], %19 {strides = array<i32>} : memref<16x4xf32, #tpu.memory_space<vmem>>, vector<16x4xf32>,
    return
  }
  func.func @transform_0(%arg0: i32) -> (i32, i32) {
    %c0_i32 = arith.constant 0 : i32
    %c0_i32_0 = arith.constant 0 : i32
    return %arg0, %c0_i32 : i32, i32
  }
  func.func @transform_1(%arg0: i32) -> (i32, i32) {
    %c0_i32 = arith.constant 0 : i32
    %c0_i32_0 = arith.constant 0 : i32
    %c0_i32_1 = arith.constant 0 : i32
    return %c0_i32, %c0_i32_0 : i32, i32
  }
  func.func @transform_2(%arg0: i32) -> (i32, i32) {
    %c0_i32 = arith.constant 0 : i32
    %c0_i32_0 = arith.constant 0 : i32
    %c0_i32_1 = arith.constant 0 : i32
    return %c0_i32, %c0_i32_0 : i32, i32
  }
  func.func @transform_3(%arg0: i32) -> (i32, i32) {
    %c0_i32 = arith.constant 0 : i32
    %c0_i32_0 = arith.constant 0 : i32
    %c0_i32_1 = arith.constant 0 : i32
    return %c0_i32, %c0_i32_0 : i32, i32
  }
  func.func @transform_4(%arg0: i32) -> i32 {
    %c0_i32 = arith.constant 0 : i32
    %c0_i32_0 = arith.constant 0 : i32
    return %c0_i32 : i32
  }
  func.func @transform_5(%arg0: i32) -> (i32, i32) {
    %c0_i32 = arith.constant 0 : i32
    %c0_i32_0 = arith.constant 0 : i32
    return %arg0, %c0_i32 : i32, i32
  }
}

</mosaic_0001>

<llo_original>
// kernel: tpu_custom_call.1
$region0: #{tpu_custom_call.1}
  #allocation0 [shape = 'u32[]', space=smem, size = 0x4, offset = 0x4, fixed_abs, tag = 'smem constant byte address 0x4 - core index']
  #allocation1 [shape = 'u32[144,128]{1,0:T(1,128)}', space=vmem, size = 0x12000, scoped, tag = 'internal scratch']
  #allocation2 [shape = 'f32[1]{0:T(128)S(6)}', space=smem, size = 0x200, scoped, tag = 'scoped memory for tpu_custom_call.1']
  %s0 = inlined_call_operand.hbm [shape: f32[50,128], index: 0, kind: input, shape index: {}]
  %s1 = inlined_call_operand.vmem [shape: f32[128,128], index: 1, kind: input, shape index: {}]
  %s2 = inlined_call_operand.vmem [shape: f32[1,128], index: 2, kind: input, shape index: {}]
  %s3 = inlined_call_operand.vmem [shape: f32[128,4], index: 3, kind: input, shape index: {}]
  %s4 = inlined_call_operand.<no memory space> [shape: f32[1], index: 4, kind: input, shape index: {}]
  %s5 = inlined_call_operand.vmem [shape: f32[50,4], index: 5, kind: output, shape index: {}]
  %s6 = sld [smem:[#allocation0]]
  $region105: #{tpu_custom_call.1} parent=0
    _
  %s8 = ssub.s32 1, %s6
  %s9 = scalar_select 0, %s8, %s6
  %10 = sst [smem:[#allocation2]] %s4
  $region1: #{tpu_custom_call.1} parent=0
    #allocation3 [shape = 'u8[16384]{0}', space=vmem, size = 0x4000, scoped, tag = 'input window, operand 0']
    #allocation4 [shape = 's32[2]{0}', space=sflag, size = 0x8, scoped, tag = 'scoped memory for tpu_custom_call.1']
    #allocation5 [shape = 'u8[16384]{0}', space=vmem, size = 0x4000, scoped, tag = 'output window, operand 0']
    %11 = vsyncpa [#allocation4], 0
    %s12 = scalar_lea.sflag [#allocation4], 1
    %13 = vsyncpa %s12, 0
    loop: start=0, step=1, limit=6
    $region2: #{tpu_custom_call.1} parent=1 // loop_pre_header
      _
    $region3: #{tpu_custom_call.1} parent=1 // loop_header
      %s15 = sphi 0, %s19
      %p16 = scmp.ge.s32.totalorder %s15, 6
      %s25 = sphi 0, %s27
      %s28 = sphi 0, %s25
      %s29 = sphi 0, %s28
      %s45 = sphi 0, %s29
      %s49 = sphi 0, %s49
      %s51 = sphi 0, %s49
      %s52 = sphi 0, %s51
      %s66 = sphi 0, %s52
      %s70 = sphi 0, %s70
      %s72 = sphi 0, %s70
      %s73 = sphi 0, %s72
      %s87 = sphi 0, %s73
      %s91 = sphi 0, %s91
      %s93 = sphi 0, %s91
      %s94 = sphi 0, %s93
      %s108 = sphi 0, %s94
      %s112 = sphi 0, %s112
      %s114 = sphi 0, %s112
      %s115 = sphi 0, %s114
      %s129 = sphi 0, %s115
      %s135 = sphi 0, %s137
      %s138 = sphi 0, %s135
      %s139 = sphi 0, %s138
      %s155 = sphi 0, %s139
    $region4: #{tpu_custom_call.1} parent=1 // loop_header_branch
      %18 = sbr.rel (%p16) target = $region8
    $region5: #{tpu_custom_call.1} parent=1 // loop_body
      %s20 = ssub.s32 %s15, 1
      %s21 = ssub.s32 %s15, 2
      %s22 = sadd.s32 %s15, 1
      %s23 = ssub.s32 %s15, %s22
      %p24 = scmp.eq.s32.totalorder %s23, 0
      %s26 = sadd.s32 %s25, 1
      %s27 = scalar_select %p24, %s25, %s26
      %p30 = pneg %p24
      %p31 = scmp.eq.s32.totalorder %s15, 3
      %p32 = por %p30, %p31
      %p33 = scmp.ne.s32.totalorder %s25, %s28
      %p34 = scmp.eq.s32.totalorder %s15, 0
      %p35 = por %p33, %p34
      %p36 = scmp.ne.s32.totalorder %s25, %s28
      %p37 = scmp.eq.s32.totalorder %s20, 3
      %p38 = por %p36, %p37
      %p39 = scmp.ne.s32.totalorder %s28, %s29
      %p40 = scmp.eq.s32.totalorder %s20, 0
      %p41 = por %p39, %p40
      %p42 = scmp.ne.s32.totalorder %s28, %s29
      %p43 = scmp.eq.s32.totalorder %s21, 3
      %p44 = por %p42, %p43
      %p46 = scmp.ne.s32.totalorder %s29, %s45
      %p47 = scmp.eq.s32.totalorder %s21, 0
      %p48 = por %p46, %p47
      %s50 = sadd.s32 %s49, 1
      %p53 = scmp.eq.s32.totalorder %s15, 3
      %p54 = scmp.ne.s32.totalorder %s49, %s51
      %p55 = scmp.eq.s32.totalorder %s15, 0
      %p56 = por %p54, %p55
      %p57 = scmp.ne.s32.totalorder %s49, %s51
      %p58 = scmp.eq.s32.totalorder %s20, 3
      %p59 = por %p57, %p58
      %p60 = scmp.ne.s32.totalorder %s51, %s52
      %p61 = scmp.eq.s32.totalorder %s20, 0
      %p62 = por %p60, %p61
      %p63 = scmp.ne.s32.totalorder %s51, %s52
      %p64 = scmp.eq.s32.totalorder %s21, 3
      %p65 = por %p63, %p64
      %p67 = scmp.ne.s32.totalorder %s52, %s66
      %p68 = scmp.eq.s32.totalorder %s21, 0
      %p69 = por %p67, %p68
      %s71 = sadd.s32 %s70, 1
      %p74 = scmp.eq.s32.totalorder %s15, 3
      %p75 = scmp.ne.s32.totalorder %s70, %s72
      %p76 = scmp.eq.s32.totalorder %s15, 0
      %p77 = por %p75, %p76
      %p78 = scmp.ne.s32.totalorder %s70, %s72
      %p79 = scmp.eq.s32.totalorder %s20, 3
      %p80 = por %p78, %p79
      %p81 = scmp.ne.s32.totalorder %s72, %s73
      %p82 = scmp.eq.s32.totalorder %s20, 0
      %p83 = por %p81, %p82
      %p84 = scmp.ne.s32.totalorder %s72, %s73
      %p85 = scmp.eq.s32.totalorder %s21, 3
      %p86 = por %p84, %p85
      %p88 = scmp.ne.s32.totalorder %s73, %s87
      %p89 = scmp.eq.s32.totalorder %s21, 0
      %p90 = por %p88, %p89
      %s92 = sadd.s32 %s91, 1
      %p95 = scmp.eq.s32.totalorder %s15, 3
      %p96 = scmp.ne.s32.totalorder %s91, %s93
      %p97 = scmp.eq.s32.totalorder %s15, 0
      %p98 = por %p96, %p97
      %p99 = scmp.ne.s32.totalorder %s91, %s93
      %p100 = scmp.eq.s32.totalorder %s20, 3
      %p101 = por %p99, %p100
      %p102 = scmp.ne.s32.totalorder %s93, %s94
      %p103 = scmp.eq.s32.totalorder %s20, 0
      %p104 = por %p102, %p103
      %p105 = scmp.ne.s32.totalorder %s93, %s94
      %p106 = scmp.eq.s32.totalorder %s21, 3
      %p107 = por %p105, %p106
      %p109 = scmp.ne.s32.totalorder %s94, %s108
      %p110 = scmp.eq.s32.totalorder %s21, 0
      %p111 = por %p109, %p110
      %s113 = sadd.s32 %s112, 1
      %p116 = scmp.eq.s32.totalorder %s15, 3
      %p117 = scmp.ne.s32.totalorder %s112, %s114
      %p118 = scmp.eq.s32.totalorder %s15, 0
      %p119 = por %p117, %p118
      %p120 = scmp.ne.s32.totalorder %s112, %s114
      %p121 = scmp.eq.s32.totalorder %s20, 3
      %p122 = por %p120, %p121
      %p123 = scmp.ne.s32.totalorder %s114, %s115
      %p124 = scmp.eq.s32.totalorder %s20, 0
      %p125 = por %p123, %p124
      %p126 = scmp.ne.s32.totalorder %s114, %s115
      %p127 = scmp.eq.s32.totalorder %s21, 3
      %p128 = por %p126, %p127
      %p130 = scmp.ne.s32.totalorder %s115, %s129
      %p131 = scmp.eq.s32.totalorder %s21, 0
      %p132 = por %p130, %p131
      %s133 = ssub.s32 %s15, %s22
      %p134 = scmp.eq.s32.totalorder %s133, 0
      %s136 = sadd.s32 %s135, 1
      %s137 = scalar_select %p134, %s135, %s136
      %p140 = pneg %p134
      %p141 = scmp.eq.s32.totalorder %s15, 3
      %p142 = por %p140, %p141
      %p143 = scmp.ne.s32.totalorder %s135, %s138
      %p144 = scmp.eq.s32.totalorder %s15, 0
      %p145 = por %p143, %p144
      %p146 = scmp.ne.s32.totalorder %s135, %s138
      %p147 = scmp.eq.s32.totalorder %s20, 3
      %p148 = por %p146, %p147
      %p149 = scmp.ne.s32.totalorder %s138, %s139
      %p150 = scmp.eq.s32.totalorder %s20, 0
      %p151 = por %p149, %p150
      %p152 = scmp.ne.s32.totalorder %s138, %s139
      %p153 = scmp.eq.s32.totalorder %s21, 3
      %p154 = por %p152, %p153
      %p156 = scmp.ne.s32.totalorder %s139, %s155
      %p157 = scmp.eq.s32.totalorder %s21, 0
      %p158 = por %p156, %p157
      %p159 = scmp.le.s32.totalorder 1, %s15
      %p160 = scmp.lt.s32.totalorder %s15, 5
      %p161 = pnand %p159, %p160
      %p162 = pneg %p161
      // Predicated region
      $region9: #{tpu_custom_call.1} parent=5 // pred_check
        _
      $region10: #{tpu_custom_call.1} parent=5 // pred_check_branch
        %164 = sbr.rel (%p161) target = $region12
      $region11: #{tpu_custom_call.1} parent=5 // pred_region
        %s165 = ssub.s32 %s15, 1
        // Predicated region
        $region13: #{tpu_custom_call.1} parent=11 // pred_check
          %p166 = pneg %p62
        $region14: #{tpu_custom_call.1} parent=11 // pred_check_branch
          %168 = sbr.rel (%p166) target = $region16
        $region15: #{tpu_custom_call.1} parent=11 // pred_region
          _
        $region16: #{tpu_custom_call.1} parent=11 // pred_fallthru
          _
        // Predicated region
        $region17: #{tpu_custom_call.1} parent=11 // pred_check
          %p169 = pneg %p83
        $region18: #{tpu_custom_call.1} parent=11 // pred_check_branch
          %171 = sbr.rel (%p169) target = $region20
        $region19: #{tpu_custom_call.1} parent=11 // pred_region
          _
        $region20: #{tpu_custom_call.1} parent=11 // pred_fallthru
          _
        // Predicated region
        $region21: #{tpu_custom_call.1} parent=11 // pred_check
          %p172 = pneg %p104
        $region22: #{tpu_custom_call.1} parent=11 // pred_check_branch
          %174 = sbr.rel (%p172) target = $region24
        $region23: #{tpu_custom_call.1} parent=11 // pred_region
          _
        $region24: #{tpu_custom_call.1} parent=11 // pred_fallthru
          _
        // Predicated region
        $region25: #{tpu_custom_call.1} parent=11 // pred_check
          %p175 = pneg %p125
        $region26: #{tpu_custom_call.1} parent=11 // pred_check_branch
          %177 = sbr.rel (%p175) target = $region28
        $region27: #{tpu_custom_call.1} parent=11 // pred_region
          _
        $region28: #{tpu_custom_call.1} parent=11 // pred_fallthru
          _
      $region12: #{tpu_custom_call.1} parent=5 // pred_fallthru
        _
      %p178 = scmp.lt.s32.totalorder %s15, 4
      // Predicated region
      $region29: #{tpu_custom_call.1} parent=5 // pred_check
        %p179 = pneg %p178
      $region30: #{tpu_custom_call.1} parent=5 // pred_check_branch
        %181 = sbr.rel (%p179) target = $region32
      $region31: #{tpu_custom_call.1} parent=5 // pred_region
        // Predicated region
        $region33: #{tpu_custom_call.1} parent=31 // pred_check
          %p182 = pneg %p35
        $region34: #{tpu_custom_call.1} parent=31 // pred_check_branch
          %184 = sbr.rel (%p182) target = $region36
        $region35: #{tpu_custom_call.1} parent=31 // pred_region
          %s185 = sand.u32 %s25, 1
          %s186 = scalar_lea.sflag [#allocation4], %s185
          %s187 = sand.u32 %s25, 1
          %s188 = smul.addr %s187, 16
          %s189 = scalar_lea.vmem [#allocation3], %s188
          %s190 = smul.u32 2, %s15
          %s191 = ssub.s32 7, %s190
          %p192 = scmp.lt.s32.totalorder %s191, 2
          %s193 = scalar_select %p192, %s191, 2
          %s194 = smul.u32 128, %s193
          %s196 = ssub.s32 256, %s194
          %197 = vsyncadd %s186, %s196
          %p198 = scmp.ne.s32.totalorder 0, %s194
          %s199 = smul.addr %s190, 128
          %s200 = scalar_lea.hbm %s0, %s199
          %s201 = smul.u32 8, %s193
          %s202 = sshll.u32 %s189, 4
          %s203 = int_to_ptr.vmem [resolvable:$true] %s202
          %s204 = sshll.u32 %s201, 4
          %208 = dma.hbm_to_vmem [thread:$0]  (%p198), %s200, %s204, %s203, %s186, 128, 128, 8
        $region36: #{tpu_custom_call.1} parent=31 // pred_fallthru
          _
      $region32: #{tpu_custom_call.1} parent=5 // pred_fallthru
        _
      %p209 = scmp.le.s32.totalorder 1, %s15
      %p210 = scmp.lt.s32.totalorder %s15, 5
      %p211 = pnand %p209, %p210
      %p212 = pneg %p211
      // Predicated region
      $region37: #{tpu_custom_call.1} parent=5 // pred_check
        _
      $region38: #{tpu_custom_call.1} parent=5 // pred_check_branch
        %214 = sbr.rel (%p211) target = $region40
      $region39: #{tpu_custom_call.1} parent=5 // pred_region
        %s215 = ssub.s32 %s15, 1
        %s216 = sand.u32 %s28, 1
        %s217 = scalar_lea.sflag [#allocation4], %s216
        %s218 = sand.u32 %s28, 1
        %s219 = smul.addr %s218, 16
        %s220 = scalar_lea.vmem [#allocation3], %s219
        // Predicated region
        $region41: #{tpu_custom_call.1} parent=39 // pred_check
          %p221 = pneg %p41
        $region42: #{tpu_custom_call.1} parent=39 // pred_check_branch
          %223 = sbr.rel (%p221) target = $region44
        $region43: #{tpu_custom_call.1} parent=39 // pred_region
          %224 = dma.done %s217, 256
        $region44: #{tpu_custom_call.1} parent=39 // pred_fallthru
          _
        %s225 = sand.u32 %s28, 1
        %s226 = scalar_lea.sflag [#allocation4], %s225
        %s227 = sand.u32 %s28, 1
        %s228 = smul.addr %s227, 16
        %s229 = scalar_lea.vmem [#allocation3], %s228
        %p230 = pneg %p41
        %p231 = pneg %p38
        %p232 = pneg %p62
        %p233 = pneg %p59
        %p234 = pneg %p83
        %p235 = pneg %p80
        %p236 = pneg %p104
        %p237 = pneg %p101
        %p238 = pneg %p125
        %p239 = pneg %p122
        %p240 = pneg %p151
        %p241 = pneg %p148
        %s242 = sand.u32 %s138, 1
        %s243 = sand.u32 %s138, 1
        %s244 = smul.addr %s243, 16
        %s245 = scalar_lea.vmem [#allocation5], %s244
        %s246 = smul.u32 2, %s20
        %s247 = ssub.s32 7, %s246
        %p248 = scmp.lt.s32.totalorder %s247, 2
        %s249 = scalar_select %p248, %s247, 2
        %s250 = smul.u32 128, %s249
        %s251 = smul.u32 2, %s20
        %s252 = ssub.s32 7, %s251
        %p253 = scmp.lt.s32.totalorder %s252, 2
        %s254 = scalar_select %p253, %s252, 2
        %s255 = smul.u32 128, %s254
        %v256 = vld [vmem:[%s220] sm:$0xff]
        %v257 = vld [vmem:[%s220 + $0x8] sm:$0xff]
        %v258 = vld [vmem:[%s1] sm:$0xff]
        %v259 = vld [vmem:[%s1 + $0x8] sm:$0xff]
        %v260 = vld [vmem:[%s1 + $0x10] sm:$0xff]
        %v261 = vld [vmem:[%s1 + $0x18] sm:$0xff]
        %v262 = vld [vmem:[%s1 + $0x20] sm:$0xff]
        %v263 = vld [vmem:[%s1 + $0x28] sm:$0xff]
        %v264 = vld [vmem:[%s1 + $0x30] sm:$0xff]
        %v265 = vld [vmem:[%s1 + $0x38] sm:$0xff]
        %v266 = vld [vmem:[%s1 + $0x40] sm:$0xff]
        %v267 = vld [vmem:[%s1 + $0x48] sm:$0xff]
        %v268 = vld [vmem:[%s1 + $0x50] sm:$0xff]
        %v269 = vld [vmem:[%s1 + $0x58] sm:$0xff]
        %v270 = vld [vmem:[%s1 + $0x60] sm:$0xff]
        %v271 = vld [vmem:[%s1 + $0x68] sm:$0xff]
        %v272 = vld [vmem:[%s1 + $0x70] sm:$0xff]
        %v273 = vld [vmem:[%s1 + $0x78] sm:$0xff]
        %v274 = vld [vmem:[%s2] sm:$0x1]
        %v276 = vlaneseq
        %v277 = vshrl.u32 %v276, 7
        %v278 = vsub.s32 0, %v277
        %v279 = vrot.slane %v274, %v278
        %281 = vmatprep.subr.mxu0 0.0
        %282 = vmatpush1.msra.mxu0 %v273
        %283 = vmatprep.subr.mxu0 0.0
        %284 = vmatpush1.msra.mxu0 %v272
        %285 = vmatprep.subr.mxu0 0.0
        %286 = vmatpush1.msra.mxu0 %v271
        %287 = vmatprep.subr.mxu0 0.0
        %288 = vmatpush1.msra.mxu0 %v270
        %289 = vmatprep.subr.mxu0 0.0
        %290 = vmatpush1.msra.mxu0 %v269
        %291 = vmatprep.subr.mxu0 0.0
        %292 = vmatpush1.msra.mxu0 %v268
        %293 = vmatprep.subr.mxu0 0.0
        %294 = vmatpush1.msra.mxu0 %v267
        %295 = vmatprep.subr.mxu0 0.0
        %296 = vmatpush1.msra.mxu0 %v266
        %297 = vmatprep.subr.mxu0 0.0
        %298 = vmatpush1.msra.mxu0 %v265
        %299 = vmatprep.subr.mxu0 0.0
        %300 = vmatpush1.msra.mxu0 %v264
        %301 = vmatprep.subr.mxu0 0.0
        %302 = vmatpush1.msra.mxu0 %v263
        %303 = vmatprep.subr.mxu0 0.0
        %304 = vmatpush1.msra.mxu0 %v262
        %305 = vmatprep.subr.mxu0 0.0
        %306 = vmatpush1.msra.mxu0 %v261
        %307 = vmatprep.subr.mxu0 0.0
        %308 = vmatpush1.msra.mxu0 %v260
        %309 = vmatprep.subr.mxu0 0.0
        %310 = vmatpush1.msra.mxu0 %v259
        %311 = vmatprep.subr.mxu0 0.0
        %312 = vmatpush1.msra.mxu0 %v258
        %313 = vmatprep.subr.mxu0 0.0
        %314 = vmatpush2.msra.mxu0 0.0
        %315 = vmatprep.subr.mxu0 0.0
        %316 = vmatpush2.msra.mxu0 0.0
        %317 = vmatprep.subr.mxu0 0.0
        %318 = vmatpush2.msra.mxu0 0.0
        %319 = vmatprep.subr.mxu0 0.0
        %320 = vmatpush2.msra.mxu0 0.0
        %321 = vmatprep.subr.mxu0 0.0
        %322 = vmatpush2.msra.mxu0 0.0
        %323 = vmatprep.subr.mxu0 0.0
        %324 = vmatpush2.msra.mxu0 0.0
        %325 = vmatprep.subr.mxu0 0.0
        %326 = vmatpush2.msra.mxu0 0.0
        %327 = vmatprep.subr.mxu0 0.0
        %328 = vmatpush2.msra.mxu0 0.0
        %329 = vmatprep.subr.mxu0 0.0
        %330 = vmatpush2.msra.mxu0 0.0
        %331 = vmatprep.subr.mxu0 0.0
        %332 = vmatpush2.msra.mxu0 0.0
        %333 = vmatprep.subr.mxu0 0.0
        %334 = vmatpush2.msra.mxu0 0.0
        %335 = vmatprep.subr.mxu0 0.0
        %336 = vmatpush2.msra.mxu0 0.0
        %337 = vmatprep.subr.mxu0 0.0
        %338 = vmatpush2.msra.mxu0 0.0
        %339 = vmatprep.subr.mxu0 0.0
        %340 = vmatpush2.msra.mxu0 0.0
        %341 = vmatprep.subr.mxu0 0.0
        %342 = vmatpush2.msra.mxu0 0.0
        %343 = vmatprep.subr.mxu0 0.0
        %344 = vmatpush2.msra.mxu0 0.0
        %345 = vmatprep.mubr.f32.mxu0 0.0
        %346 = vmatmul.mubr.f32.gmra.mxu0 %v256
        %v347 = vpop.f32.mrf.mxu0
        %v348 = vadd.f32 %v279, %v347
        %v349 = vpop.f32.mrf.mxu0
        %350 = vmatprep.mubr.f32.mxu0 0.0
        %351 = vmatmul.mubr.f32.gmra.mxu0 %v257
        %v352 = vpop.f32.mrf.mxu0
        %v353 = vadd.f32 %v279, %v352
        %v354 = vpop.f32.mrf.mxu0
        %355 = vdwg.mxu0
        %v356 = vmax.f32 %v348, 0.0
        %v357 = vmax.f32 %v353, 0.0
        %v358 = vld [vmem:[%s3] sm:$0xff]
        %v359 = vld [vmem:[%s3 + $0x8] sm:$0xff]
        %v360 = vld [vmem:[%s3 + $0x10] sm:$0xff]
        %v361 = vld [vmem:[%s3 + $0x18] sm:$0xff]
        %v362 = vld [vmem:[%s3 + $0x20] sm:$0xff]
        %v363 = vld [vmem:[%s3 + $0x28] sm:$0xff]
        %v364 = vld [vmem:[%s3 + $0x30] sm:$0xff]
        %v365 = vld [vmem:[%s3 + $0x38] sm:$0xff]
        %v366 = vld [vmem:[%s3 + $0x40] sm:$0xff]
        %v367 = vld [vmem:[%s3 + $0x48] sm:$0xff]
        %v368 = vld [vmem:[%s3 + $0x50] sm:$0xff]
        %v369 = vld [vmem:[%s3 + $0x58] sm:$0xff]
        %v370 = vld [vmem:[%s3 + $0x60] sm:$0xff]
        %v371 = vld [vmem:[%s3 + $0x68] sm:$0xff]
        %v372 = vld [vmem:[%s3 + $0x70] sm:$0xff]
        %v373 = vld [vmem:[%s3 + $0x78] sm:$0xff]
        %s374 = sld [smem:[#allocation2]]
        %v375 = vstv %s374
        %376 = vmatprep.subr.mxu0 0.0
        %377 = vmatpush1.msra.mxu0 %v373
        %378 = vmatprep.subr.mxu0 0.0
        %379 = vmatpush1.msra.mxu0 %v372
        %380 = vmatprep.subr.mxu0 0.0
        %381 = vmatpush1.msra.mxu0 %v371
        %382 = vmatprep.subr.mxu0 0.0
        %383 = vmatpush1.msra.mxu0 %v370
        %384 = vmatprep.subr.mxu0 0.0
        %385 = vmatpush1.msra.mxu0 %v369
        %386 = vmatprep.subr.mxu0 0.0
        %387 = vmatpush1.msra.mxu0 %v368
        %388 = vmatprep.subr.mxu0 0.0
        %389 = vmatpush1.msra.mxu0 %v367
        %390 = vmatprep.subr.mxu0 0.0
        %391 = vmatpush1.msra.mxu0 %v366
        %392 = vmatprep.subr.mxu0 0.0
        %393 = vmatpush1.msra.mxu0 %v365
        %394 = vmatprep.subr.mxu0 0.0
        %395 = vmatpush1.msra.mxu0 %v364
        %396 = vmatprep.subr.mxu0 0.0
        %397 = vmatpush1.msra.mxu0 %v363
        %398 = vmatprep.subr.mxu0 0.0
        %399 = vmatpush1.msra.mxu0 %v362
        %400 = vmatprep.subr.mxu0 0.0
        %401 = vmatpush1.msra.mxu0 %v361
        %402 = vmatprep.subr.mxu0 0.0
        %403 = vmatpush1.msra.mxu0 %v360
        %404 = vmatprep.subr.mxu0 0.0
        %405 = vmatpush1.msra.mxu0 %v359
        %406 = vmatprep.subr.mxu0 0.0
        %407 = vmatpush1.msra.mxu0 %v358
        %408 = vmatprep.subr.mxu0 0.0
        %409 = vmatpush2.msra.mxu0 0.0
        %410 = vmatprep.subr.mxu0 0.0
        %411 = vmatpush2.msra.mxu0 0.0
        %412 = vmatprep.subr.mxu0 0.0
        %413 = vmatpush2.msra.mxu0 0.0
        %414 = vmatprep.subr.mxu0 0.0
        %415 = vmatpush2.msra.mxu0 0.0
        %416 = vmatprep.subr.mxu0 0.0
        %417 = vmatpush2.msra.mxu0 0.0
        %418 = vmatprep.subr.mxu0 0.0
        %419 = vmatpush2.msra.mxu0 0.0
        %420 = vmatprep.subr.mxu0 0.0
        %421 = vmatpush2.msra.mxu0 0.0
        %422 = vmatprep.subr.mxu0 0.0
        %423 = vmatpush2.msra.mxu0 0.0
        %424 = vmatprep.subr.mxu0 0.0
        %425 = vmatpush2.msra.mxu0 0.0
        %426 = vmatprep.subr.mxu0 0.0
        %427 = vmatpush2.msra.mxu0 0.0
        %428 = vmatprep.subr.mxu0 0.0
        %429 = vmatpush2.msra.mxu0 0.0
        %430 = vmatprep.subr.mxu0 0.0
        %431 = vmatpush2.msra.mxu0 0.0
        %432 = vmatprep.subr.mxu0 0.0
        %433 = vmatpush2.msra.mxu0 0.0
        %434 = vmatprep.subr.mxu0 0.0
        %435 = vmatpush2.msra.mxu0 0.0
        %436 = vmatprep.subr.mxu0 0.0
        %437 = vmatpush2.msra.mxu0 0.0
        %438 = vmatprep.subr.mxu0 0.0
        %439 = vmatpush2.msra.mxu0 0.0
        %440 = vmatprep.mubr.f32.mxu0 0.0
        %441 = vmatmul.mubr.f32.gmra.mxu0 %v356
        %v442 = vpop.f32.mrf.mxu0
        %v443 = vadd.f32 %v375, %v442
        %v444 = vpop.f32.mrf.mxu0
        %445 = vmatprep.mubr.f32.mxu0 0.0
        %446 = vmatmul.mubr.f32.gmra.mxu0 %v357
        %v447 = vpop.f32.mrf.mxu0
        %v448 = vadd.f32 %v375, %v447
        %v449 = vpop.f32.mrf.mxu0
        %450 = vdwg.mxu0
        %v451 = vmul.f32 %v443, 0.5
        %v452 = vmul.f32 %v448, 0.5
        %v453 = vtanh.pop %v451
        %v454 = vtanh.pop %v452
        %v455 = vadd.f32 %v453, 1.0
        %v456 = vadd.f32 %v454, 1.0
        %v457 = vmul.f32 %v455, 0.5
        %v458 = vmul.f32 %v456, 0.5
        %vm459 = vcmask 31744
        %460 = vst.msk [vmem:[%s245] sm:$0xff] %vm459, %v457
        %461 = vst.msk [vmem:[%s245 + $0x8] sm:$0xff] %vm459, %v458
        %s462 = sand.u32 %s138, 1
        %s463 = sand.u32 %s138, 1
        %s464 = smul.addr %s463, 16
        %s465 = scalar_lea.vmem [#allocation5], %s464
        // Predicated region
        $region45: #{tpu_custom_call.1} parent=39 // pred_check
          %p466 = pneg %p148
        $region46: #{tpu_custom_call.1} parent=39 // pred_check_branch
          %468 = sbr.rel (%p466) target = $region48
        $region47: #{tpu_custom_call.1} parent=39 // pred_region
          %s469 = smul.u32 2, %s20
          %s470 = ssub.s32 7, %s469
          %p471 = scmp.lt.s32.totalorder %s470, 2
          %s472 = scalar_select %p471, %s470, 2
          %s473 = smul.u32 128, %s472
          %p474 = scmp.ne.s32.totalorder 0, %s473
          %s475 = smul.addr %s469, 8
          %s476 = scalar_lea.vmem %s5, %s475
          // Predicated region
          $region49: #{tpu_custom_call.1} parent=47 // pred_check
            %p477 = pneg %p474
          $region50: #{tpu_custom_call.1} parent=47 // pred_check_branch
            %479 = sbr.rel (%p477) target = $region52
          $region51: #{tpu_custom_call.1} parent=47 // pred_region
            // Predicated region
            $region53: #{tpu_custom_call.1} parent=51 // pred_check
              _
            $region54: #{tpu_custom_call.1} parent=51 // pred_check_branch
              %481 = sbr.rel (0) target = $region56
            $region55: #{tpu_custom_call.1} parent=51 // pred_region
              // Predicated region
              $region75: #{tpu_custom_call.1} parent=55 // pred_check
                _
              $region76: #{tpu_custom_call.1} parent=55 // pred_check_branch
                %533 = sbr.rel (0) target = $region78
              $region77: #{tpu_custom_call.1} parent=55 // pred_region
                %s534 = sshrl.u32 %s472, 1
                // While loop
                $region79: #{tpu_custom_call.1} parent=77 // loop_pre_header
                  _
                $region80: #{tpu_custom_call.1} parent=77 // loop_header
                  %s536 = sphi 0, %s538
                  %p537 = scmp.ge.s32.totalorder %s536, %s534
                  %s541 = sphi 0, %s550
                  %s542 = sphi %s465, %s553
                  %s543 = sphi %s476, %s554
                $region81: #{tpu_custom_call.1} parent=77 // loop_header_branch
                  %540 = sbr.rel (%p537) target = $region85
                $region82: #{tpu_custom_call.1} parent=77 // loop_body
                  %v544 = vld [vmem:[%s542] sm:$0xff]
                  %545 = vst [vmem:[%s543] sm:$0xff] %v544
                  %v546 = vld [vmem:[%s542 + $0x8] sm:$0xff]
                  %547 = vst [vmem:[%s543 + $0x8] sm:$0xff] %v546
                  %s548 = sadd.s32 1, %s541
                  %p549 = scmp.ge.s32.totalorder %s548, %s534
                  %s550 = scalar_select %p549, 0, %s548
                  %s551 = smul.u32 %s550, 16
                  %s552 = smul.u32 %s550, 16
                  %s553 = scalar_lea.vmem %s465, %s551 [#allocation5]
                  %s554 = scalar_lea.vmem %s476, %s552
                $region83: #{tpu_custom_call.1} parent=77 // loop_footer
                  %s538 = sadd.s32 %s536, 1
                $region84: #{tpu_custom_call.1} parent=77 // loop_footer_branch
                  %535 = sbr.rel target = $region80
                $region85: #{tpu_custom_call.1} parent=77 // loop_exit
                  _
                %s555 = sshrl.u32 %s472, 1
                %s556 = sand.u32 %s472, 1
                %s557 = smul.u32 %s555, 2
                %s558 = smul.u32 8, %s557
                %s559 = scalar_lea.vmem %s465, %s558 [#allocation5]
                %s560 = smul.u32 8, %s557
                %s561 = scalar_lea.vmem %s476, %s560
                // While loop
                $region86: #{tpu_custom_call.1} parent=77 // loop_pre_header
                  _
                $region87: #{tpu_custom_call.1} parent=77 // loop_header
                  %s563 = sphi 0, %s565
                  %p564 = scmp.ge.s32.totalorder %s563, %s556
                  %s568 = sphi 0, %s575
                  %s569 = sphi %s559, %s578
                  %s570 = sphi %s561, %s579
                $region88: #{tpu_custom_call.1} parent=77 // loop_header_branch
                  %567 = sbr.rel (%p564) target = $region92
                $region89: #{tpu_custom_call.1} parent=77 // loop_body
                  %v571 = vld [vmem:[%s569] sm:$0xff]
                  %572 = vst [vmem:[%s570] sm:$0xff] %v571
                  %s573 = sadd.s32 1, %s568
                  %p574 = scmp.ge.s32.totalorder %s573, %s556
                  %s575 = scalar_select %p574, 0, %s573
                  %s576 = smul.u32 %s575, 8
                  %s577 = smul.u32 %s575, 8
                  %s578 = scalar_lea.vmem %s559, %s576 [#allocation5]
                  %s579 = scalar_lea.vmem %s561, %s577
                $region90: #{tpu_custom_call.1} parent=77 // loop_footer
                  %s565 = sadd.s32 %s563, 1
                $region91: #{tpu_custom_call.1} parent=77 // loop_footer_branch
                  %562 = sbr.rel target = $region87
                $region92: #{tpu_custom_call.1} parent=77 // loop_exit
                  _
              $region78: #{tpu_custom_call.1} parent=55 // pred_fallthru
                _
              // Predicated region
              $region93: #{tpu_custom_call.1} parent=55 // pred_check
                _
              $region94: #{tpu_custom_call.1} parent=55 // pred_check_branch
                %581 = sbr.rel target = $region96
              $region95: #{tpu_custom_call.1} parent=55 // pred_region
                _
              $region96: #{tpu_custom_call.1} parent=55 // pred_fallthru
                _
            $region56: #{tpu_custom_call.1} parent=51 // pred_fallthru
              _
            // Predicated region
            $region57: #{tpu_custom_call.1} parent=51 // pred_check
              _
            $region58: #{tpu_custom_call.1} parent=51 // pred_check_branch
              %483 = sbr.rel target = $region60
            $region59: #{tpu_custom_call.1} parent=51 // pred_region
              %s485 = ssub.s32 256, 1
              %s486 = sshrl.u32 %s472, 1
              // While loop
              $region61: #{tpu_custom_call.1} parent=59 // loop_pre_header
                _
              $region62: #{tpu_custom_call.1} parent=59 // loop_header
                %s488 = sphi 0, %s490
                %p489 = scmp.ge.s32.totalorder %s488, %s486
                %s493 = sphi 0, %s502
                %s494 = sphi %s465, %s505
                %s495 = sphi %s476, %s506
              $region63: #{tpu_custom_call.1} parent=59 // loop_header_branch
                %492 = sbr.rel (%p489) target = $region67
              $region64: #{tpu_custom_call.1} parent=59 // loop_body
                %v496 = vld [vmem:[%s494] sm:%s485]
                %497 = vst [vmem:[%s495] sm:%s485] %v496
                %v498 = vld [vmem:[%s494 + $0x8] sm:%s485]
                %499 = vst [vmem:[%s495 + $0x8] sm:%s485] %v498
                %s500 = sadd.s32 1, %s493
                %p501 = scmp.ge.s32.totalorder %s500, %s486
                %s502 = scalar_select %p501, 0, %s500
                %s503 = smul.u32 %s502, 16
                %s504 = smul.u32 %s502, 16
                %s505 = scalar_lea.vmem %s465, %s503 [#allocation5]
                %s506 = scalar_lea.vmem %s476, %s504
              $region65: #{tpu_custom_call.1} parent=59 // loop_footer
                %s490 = sadd.s32 %s488, 1
              $region66: #{tpu_custom_call.1} parent=59 // loop_footer_branch
                %487 = sbr.rel target = $region62
              $region67: #{tpu_custom_call.1} parent=59 // loop_exit
                _
              %s507 = sshrl.u32 %s472, 1
              %s508 = sand.u32 %s472, 1
              %s509 = smul.u32 %s507, 2
              %s510 = smul.u32 8, %s509
              %s511 = scalar_lea.vmem %s465, %s510 [#allocation5]
              %s512 = smul.u32 8, %s509
              %s513 = scalar_lea.vmem %s476, %s512
              // While loop
              $region68: #{tpu_custom_call.1} parent=59 // loop_pre_header
                _
              $region69: #{tpu_custom_call.1} parent=59 // loop_header
                %s515 = sphi 0, %s517
                %p516 = scmp.ge.s32.totalorder %s515, %s508
                %s520 = sphi 0, %s527
                %s521 = sphi %s511, %s530
                %s522 = sphi %s513, %s531
              $region70: #{tpu_custom_call.1} parent=59 // loop_header_branch
                %519 = sbr.rel (%p516) target = $region74
              $region71: #{tpu_custom_call.1} parent=59 // loop_body
                %v523 = vld [vmem:[%s521] sm:%s485]
                %524 = vst [vmem:[%s522] sm:%s485] %v523
                %s525 = sadd.s32 1, %s520
                %p526 = scmp.ge.s32.totalorder %s525, %s508
                %s527 = scalar_select %p526, 0, %s525
                %s528 = smul.u32 %s527, 8
                %s529 = smul.u32 %s527, 8
                %s530 = scalar_lea.vmem %s511, %s528 [#allocation5]
                %s531 = scalar_lea.vmem %s513, %s529
              $region72: #{tpu_custom_call.1} parent=59 // loop_footer
                %s517 = sadd.s32 %s515, 1
              $region73: #{tpu_custom_call.1} parent=59 // loop_footer_branch
                %514 = sbr.rel target = $region69
              $region74: #{tpu_custom_call.1} parent=59 // loop_exit
                _
            $region60: #{tpu_custom_call.1} parent=51 // pred_fallthru
              _
          $region52: #{tpu_custom_call.1} parent=47 // pred_fallthru
            _
          %582 = vnop
        $region48: #{tpu_custom_call.1} parent=39 // pred_fallthru
          _
      $region40: #{tpu_custom_call.1} parent=5 // pred_fallthru
        _
      %p583 = scmp.le.s32.totalorder 2, %s15
      // Predicated region
      $region97: #{tpu_custom_call.1} parent=5 // pred_check
        %p584 = pneg %p583
      $region98: #{tpu_custom_call.1} parent=5 // pred_check_branch
        %586 = sbr.rel (%p584) target = $region100
      $region99: #{tpu_custom_call.1} parent=5 // pred_region
        %s587 = ssub.s32 %s15, 2
        // Predicated region
        $region101: #{tpu_custom_call.1} parent=99 // pred_check
          %p588 = pneg %p154
        $region102: #{tpu_custom_call.1} parent=99 // pred_check_branch
          %590 = sbr.rel (%p588) target = $region104
        $region103: #{tpu_custom_call.1} parent=99 // pred_region
          %s591 = sand.u32 %s139, 1
          %s592 = sand.u32 %s139, 1
          %s593 = smul.addr %s592, 16
          %s594 = scalar_lea.vmem [#allocation5], %s593
        $region104: #{tpu_custom_call.1} parent=99 // pred_fallthru
          _
      $region100: #{tpu_custom_call.1} parent=5 // pred_fallthru
        _
    $region6: #{tpu_custom_call.1} parent=1 // loop_footer
      %s19 = sadd.s32 1, %s15
    $region7: #{tpu_custom_call.1} parent=1 // loop_footer_branch
      %14 = sbr.rel target = $region3
    $region8: #{tpu_custom_call.1} parent=1 // loop_exit
      _
    %595 = vsyncpa [#allocation4], 1
    %s596 = scalar_lea.sflag [#allocation4], 1
    %597 = vsyncpa %s596, 1

</llo_original>
